<compile_context>
chip_gen: v6e
topology: v6e:2x2x1
jax: 0.10.0
libtpu: 0.0.40
codegen_flags: <defaults>
</compile_context>

<pallas_src>
import functools

import jax
import jax.numpy as jnp
from jax.experimental import pallas as pl
from jax.experimental.pallas import tpu as pltpu


# ---------------------------------------------------------------------------
# Kernel 1: adaptive avg pool over the joint axis V (row-tiled)
# ---------------------------------------------------------------------------
def pool_kernel(x_ref, o_ref):
    # x_ref: (MT, C, V) -> o_ref: (MT, C); mean over joints V.
    o_ref[...] = jnp.mean(x_ref[...], axis=-1).astype(o_ref.dtype)


# ---------------------------------------------------------------------------
# Kernel 2: G network (Linear -> BN (batch stats) -> ReLU -> Linear -> Softmax)
# ---------------------------------------------------------------------------
def g_kernel(p_ref, w1_ref, w2_ref, gamma_ref, beta_ref, k_ref):
    # p_ref: (R, t) pooled rows, w1: (t, 2t), w2: (2t, K), gamma/beta: (1, 2t)
    # k_ref: (R, K) per-row softmax conv taps.
    pooled = p_ref[...]
    h = jnp.dot(pooled, w1_ref[...], preferred_element_type=jnp.float32)   # (R, 2t)
    # BatchNorm1d, training-mode forward: biased batch statistics over all R.
    mean = jnp.mean(h, axis=0, keepdims=True)
    var = jnp.mean(jnp.square(h - mean), axis=0, keepdims=True)
    h = (h - mean) * jax.lax.rsqrt(var + 1e-5)
    h = h * gamma_ref[...] + beta_ref[...]
    h = jnp.maximum(h, 0.0)
    logits = jnp.dot(h, w2_ref[...], preferred_element_type=jnp.float32)   # (R, K)
    m = jnp.max(logits, axis=-1, keepdims=True)
    e = jnp.exp(logits - m)
    k_ref[...] = (e / jnp.sum(e, axis=-1, keepdims=True)).astype(k_ref.dtype)
    # TODO(synk): if R grows so (R, 2t) no longer fits VMEM, convert the BN
    # statistics to a two-pass reduction grid (pl.when init/finalize).


# ---------------------------------------------------------------------------
# Kernel 3: depthwise temporal conv in the native (n_batch, t, C*V) layout
# ---------------------------------------------------------------------------
def dwconv_kernel(x_ref, k_ref, o_ref):
    # x_ref: (NB, t, CV), k_ref: (NB, K, CV) taps already broadcast over V,
    # o_ref: (NB, t, CV).  'same' padding via masked edge-tap adds.
    t = x_ref.shape[1]
    ksz = k_ref.shape[1]
    pad = (ksz - 1) // 2
    x = x_ref[...]
    k = k_ref[...]
    # Center tap covers (and initializes) the whole output block.
    o_ref[...] = (x * k[:, pad:pad + 1, :]).astype(o_ref.dtype)
    # Edge taps: static sub-slices of the block -- no pad/concat copies.
    for j in range(ksz):
        d = j - pad                       # temporal offset of this tap
        if d == 0 or abs(d) >= t:
            continue
        kj = k[:, j:j + 1, :]
        if d > 0:
            # out[:, 0:t-d, :] += k_j * x[:, d:t, :]
            o_ref[:, :t - d, :] = (o_ref[:, :t - d, :]
                                   + x[:, d:, :] * kj).astype(o_ref.dtype)
        else:
            s = -d
            # out[:, s:t, :] += k_j * x[:, 0:t-s, :]
            o_ref[:, s:, :] = (o_ref[:, s:, :]
                               + x[:, :t - s, :] * kj).astype(o_ref.dtype)


# ---------------------------------------------------------------------------
# Tile picker: largest divisor of `total` whose block stays under the byte
# target, aligned when required, and keeping >= 2 grid steps when possible
# (so both TensorCores on v7x get work).
# ---------------------------------------------------------------------------
def _pick_tile(total, unit_bytes, *, align=1, target_bytes=2 * 1024 * 1024):
    cap = max(1, min(total, target_bytes // max(unit_bytes, 1)))
    if total > 1:
        cap = min(cap, max(1, total // 2))
    best = 0
    for d in range(1, cap + 1):
        if total % d == 0 and (align == 1 or d % align == 0):
            best = d
    return best if best else total


# ---------------------------------------------------------------------------
# Wrapper: reshapes only (zero-copy); all heavy compute lives in the kernels.
# ---------------------------------------------------------------------------
@functools.partial(jax.jit, static_argnames=("n_segment", "kernel_size",
                                             "stride", "padding"))
def global_tam_skeleton(x, w1, w2, gamma, beta, *, n_segment,
                        kernel_size=3, stride=1, padding=1):
    assert stride == 1 and 2 * padding == kernel_size - 1, \
        "only stride=1 with odd-K 'same' temporal padding is implemented"
    # TODO(synk): non-unit stride / asymmetric padding of F.conv2d not implemented.
    N, T, C, V = x.shape
    t = n_segment
    n_batch = (N * T) // t
    R = n_batch * C
    M = n_batch * t                      # == N * T
    CV = C * V
    K = kernel_size

    xf = x.astype(jnp.float32)
    x_m = xf.reshape(M, C, V)            # pure reshape (no data movement)
    x_rows = xf.reshape(n_batch, t, CV)  # pure reshape (no data movement)

    # --- kernel 1: avg pool over V, tiled over the N*T rows ----------------
    mt = _pick_tile(M, C * V * 4, align=8)
    pooled_mc = pl.pallas_call(
        pool_kernel,
        out_shape=jax.ShapeDtypeStruct((M, C), jnp.float32),
        grid=(M // mt,),
        in_specs=[pl.BlockSpec((mt, C, V), lambda i: (i, 0, 0))],
        out_specs=pl.BlockSpec((mt, C), lambda i: (i, 0)),
        compiler_params=pltpu.CompilerParams(dimension_semantics=("parallel",)),
    )(x_m)
    # Tiny (N*T, C) transpose so each G row is one (batch, channel) pair.
    pooled = pooled_mc.reshape(n_batch, t, C).transpose(0, 2, 1).reshape(R, t)

    # --- kernel 2: G network -> per-row conv taps ---------------------------
    w1_t = jnp.transpose(w1).astype(jnp.float32)          # (t, 2t)
    w2_t = jnp.transpose(w2).astype(jnp.float32)          # (2t, K)
    gamma2 = gamma.reshape(1, 2 * t).astype(jnp.float32)
    beta2 = beta.reshape(1, 2 * t).astype(jnp.float32)
    kern = pl.pallas_call(
        g_kernel,
        out_shape=jax.ShapeDtypeStruct((R, K), jnp.float32),
        grid=(1,),
        in_specs=[
            pl.BlockSpec((R, t), lambda i: (0, 0)),
            pl.BlockSpec((t, 2 * t), lambda i: (0, 0)),
            pl.BlockSpec((2 * t, K), lambda i: (0, 0)),
            pl.BlockSpec((1, 2 * t), lambda i: (0, 0)),
            pl.BlockSpec((1, 2 * t), lambda i: (0, 0)),
        ],
        out_specs=pl.BlockSpec((R, K), lambda i: (0, 0)),
    )(pooled, w1_t, w2_t, gamma2, beta2)

    # Broadcast the (b, c) taps over V so the conv kernel sees a lane-dense
    # (n_batch, K, C*V) coefficient array (tiny: K/t of the data size).
    kern_bkc = jnp.transpose(kern.reshape(n_batch, C, K), (0, 2, 1))   # (B, K, C)
    kern_cv = jnp.broadcast_to(kern_bkc[:, :, :, None],
                               (n_batch, K, C, V)).reshape(n_batch, K, CV)

    # --- kernel 3: depthwise temporal conv, lane-dense (NB, t, C*V) blocks --
    # TODO(synk): if t*C*V blocks ever exceed the scoped-VMEM budget
    # (v7x: 32 MiB scoped / 64 MiB physical), tile along t with a K-1 halo.
    nb = _pick_tile(n_batch, t * CV * 4, align=1)
    out_rows = pl.pallas_call(
        dwconv_kernel,
        out_shape=jax.ShapeDtypeStruct((n_batch, t, CV), jnp.float32),
        grid=(n_batch // nb,),
        in_specs=[
            pl.BlockSpec((nb, t, CV), lambda i: (i, 0, 0)),
            pl.BlockSpec((nb, K, CV), lambda i: (i, 0, 0)),
        ],
        out_specs=pl.BlockSpec((nb, t, CV), lambda i: (i, 0, 0)),
        compiler_params=pltpu.CompilerParams(dimension_semantics=("parallel",)),
    )(x_rows, kern_cv)

    # (n_batch, t, C*V) == (N, T, C, V) memory layout: pure reshape, no transpose.
    return out_rows.reshape(N, T, C, V).astype(x.dtype)


# ---------------------------------------------------------------------------
# Pure-JAX reference (mirrors the PyTorch forward) for correctness checking
# ---------------------------------------------------------------------------
def reference(x, w1, w2, gamma, beta, *, n_segment, kernel_size=3, padding=1):
    N, T, C, V = x.shape
    t = n_segment
    n_batch = (N * T) // t
    new_x = jnp.transpose(x.reshape(n_batch, t, C, V), (0, 2, 1, 3))  # (NB,C,t,V)
    pooled = jnp.mean(new_x, axis=-1).reshape(-1, t)                   # (NB*C, t)
    h = pooled @ w1.T
    mean = jnp.mean(h, axis=0, keepdims=True)
    var = jnp.mean(jnp.square(h - mean), axis=0, keepdims=True)
    h = (h - mean) / jnp.sqrt(var + 1e-5) * gamma + beta
    h = jnp.maximum(h, 0.0)
    logits = h @ w2.T
    kern = jax.nn.softmax(logits, axis=-1)                             # (NB*C, K)
    rows = new_x.reshape(-1, t, V)
    xp = jnp.pad(rows, ((0, 0), (padding, padding), (0, 0)))
    out = jnp.zeros_like(rows)
    for j in range(kernel_size):
        out = out + kern[:, j][:, None, None] * xp[:, j:j + t, :]
    out = jnp.transpose(out.reshape(n_batch, C, t, V), (0, 2, 1, 3))
    return out.reshape(N, T, C, V)


if __name__ == "__main__":
    # Small shapes consistent with the module (x is (N, T, C, V), T == n_segment).
    # C*V = 128 so the conv blocks are exactly lane-dense.
    N, T, C, V = 4, 8, 8, 16
    n_segment, kernel_size = T, 3

    key = jax.random.PRNGKey(0)
    k_x, k_w1, k_w2 = jax.random.split(key, 3)
    x = jax.random.normal(k_x, (N, T, C, V), dtype=jnp.float32)

    # PyTorch parameter shapes:
    #   G[0]: Linear(n_segment, 2*n_segment, bias=False)   -> weight (2T, T)
    #   G[1]: BatchNorm1d(2*n_segment)                      -> gamma/beta (2T,)
    #   G[3]: Linear(2*n_segment, kernel_size, bias=False)  -> weight (K, 2T)
    w1 = 0.1 * jax.random.normal(k_w1, (2 * T, T), dtype=jnp.float32)
    w2 = 0.1 * jax.random.normal(k_w2, (kernel_size, 2 * T), dtype=jnp.float32)
    gamma = jnp.ones((2 * T,), dtype=jnp.float32)
    beta = jnp.zeros((2 * T,), dtype=jnp.float32)

    out = global_tam_skeleton(x, w1, w2, gamma, beta,
                              n_segment=n_segment, kernel_size=kernel_size)
    out = jax.block_until_ready(out)

    ref = reference(x, w1, w2, gamma, beta,
                    n_segment=n_segment, kernel_size=kernel_size)
    assert out.shape == (N, T, C, V)
    assert jnp.allclose(out, ref, atol=1e-5, rtol=1e-5), "mismatch vs reference"

    print("KERNEL_OK")
</pallas_src>

<mosaic_0001>
module attributes {stable_mosaic.version = 11 : i64} {
  func.func @pool_kernel(%arg0: i32, %arg1: memref<16x8x16xf32, #tpu.memory_space<vmem>>, %arg2: memref<16x8xf32, #tpu.memory_space<vmem>>) attributes {dimension_semantics = [#tpu.dimension_semantics<parallel>], iteration_bounds = array<i64: 2>, scalar_prefetch = 0 : i64, scratch_operands = 0 : i64, tpu.core_type = #tpu.core_type<tc>, window_params = [{transform_indices = @transform_0, window_bounds = array<i64: 16, 8, 16>}, {transform_indices = @transform_1, window_bounds = array<i64: 16, 8>}]} {
    %c0 = arith.constant 0 : index
    %c0_0 = arith.constant 0 : index
    %c0_1 = arith.constant 0 : index
    %0 = vector.load %arg1[%c0, %c0_0, %c0_1] : memref<16x8x16xf32, #tpu.memory_space<vmem>>, vector<16x8x16xf32>
    %cst = arith.constant dense<0.000000e+00> : vector<16x8xf32>
    %1 = vector.multi_reduction <add>, %0, %cst [2] : vector<16x8x16xf32> to vector<16x8xf32>
    %cst_2 = arith.constant 1.600000e+01 : f32
    %2 = vector.broadcast %cst_2 : f32 to vector<16x8xf32>
    %3 = arith.divf %1, %2 : vector<16x8xf32>
    %c0_3 = arith.constant 0 : index
    %c0_4 = arith.constant 0 : index
    %4 = vector.load %arg2[%c0_3, %c0_4] : memref<16x8xf32, #tpu.memory_space<vmem>>, vector<16x8xf32>
    tpu.vector_store %arg2[%c0_3, %c0_4], %3 {strides = array<i32>} : memref<16x8xf32, #tpu.memory_space<vmem>>, vector<16x8xf32>,
    return
  }
  func.func @transform_0(%arg0: i32) -> (i32, i32, i32) {
    %c0_i32 = arith.constant 0 : i32
    %c0_i32_0 = arith.constant 0 : i32
    %c0_i32_1 = arith.constant 0 : i32
    return %arg0, %c0_i32, %c0_i32_0 : i32, i32, i32
  }
  func.func @transform_1(%arg0: i32) -> (i32, i32) {
    %c0_i32 = arith.constant 0 : i32
    %c0_i32_0 = arith.constant 0 : i32
    return %arg0, %c0_i32 : i32, i32
  }
}

module attributes {stable_mosaic.version = 11 : i64} {
  func.func @g_kernel(%arg0: i32, %arg1: memref<32x8xf32, #tpu.memory_space<vmem>>, %arg2: memref<8x16xf32, #tpu.memory_space<vmem>>, %arg3: memref<16x3xf32, #tpu.memory_space<vmem>>, %arg4: memref<1x16xf32, #tpu.memory_space<vmem>>, %arg5: memref<1x16xf32, #tpu.memory_space<vmem>>, %arg6: memref<32x3xf32, #tpu.memory_space<vmem>>) attributes {dimension_semantics = [#tpu.dimension_semantics<arbitrary>], iteration_bounds = array<i64: 1>, scalar_prefetch = 0 : i64, scratch_operands = 0 : i64, tpu.core_type = #tpu.core_type<tc>, window_params = [{pipeline_mode = #tpu.pipeline_mode<synchronous>, transform_indices = @transform_0, window_bounds = array<i64: 32, 8>}, {pipeline_mode = #tpu.pipeline_mode<synchronous>, transform_indices = @transform_1, window_bounds = array<i64: 8, 16>}, {pipeline_mode = #tpu.pipeline_mode<synchronous>, transform_indices = @transform_2, window_bounds = array<i64: 16, 3>}, {pipeline_mode = #tpu.pipeline_mode<synchronous>, transform_indices = @transform_3, window_bounds = array<i64: 1, 16>}, {pipeline_mode = #tpu.pipeline_mode<synchronous>, transform_indices = @transform_4, window_bounds = array<i64: 1, 16>}, {pipeline_mode = #tpu.pipeline_mode<synchronous>, transform_indices = @transform_5, window_bounds = array<i64: 32, 3>}]} {
    %c0 = arith.constant 0 : index
    %c0_0 = arith.constant 0 : index
    %0 = vector.load %arg1[%c0, %c0_0] : memref<32x8xf32, #tpu.memory_space<vmem>>, vector<32x8xf32>
    %c0_1 = arith.constant 0 : index
    %c0_2 = arith.constant 0 : index
    %1 = vector.load %arg2[%c0_1, %c0_2] : memref<8x16xf32, #tpu.memory_space<vmem>>, vector<8x16xf32>
    %cst = arith.constant dense<0.000000e+00> : vector<32x16xf32>
    %2 = tpu.matmul %0, %1, %cst {dimension_numbers = #tpu.dot_dimension_numbers<[1], [0], [0], [1], [0, 0, 1, 1], [], []>} : vector<32x8xf32>, vector<8x16xf32>, vector<32x16xf32> -> vector<32x16xf32>
    %cst_3 = arith.constant dense<0.000000e+00> : vector<16xf32>
    %3 = vector.multi_reduction <add>, %2, %cst_3 [0] : vector<32x16xf32> to vector<16xf32>
    %4 = vector.shape_cast %3 : vector<16xf32> to vector<1x16xf32>
    %cst_4 = arith.constant 3.200000e+01 : f32
    %5 = vector.broadcast %cst_4 : f32 to vector<1x16xf32>
    %6 = arith.divf %4, %5 : vector<1x16xf32>
    %7 = vector.broadcast %6 : vector<1x16xf32> to vector<32x16xf32>
    %8 = arith.subf %2, %7 : vector<32x16xf32>
    %9 = arith.mulf %8, %8 : vector<32x16xf32>
    %cst_5 = arith.constant dense<0.000000e+00> : vector<16xf32>
    %10 = vector.multi_reduction <add>, %9, %cst_5 [0] : vector<32x16xf32> to vector<16xf32>
    %11 = vector.shape_cast %10 : vector<16xf32> to vector<1x16xf32>
    %cst_6 = arith.constant 3.200000e+01 : f32
    %12 = vector.broadcast %cst_6 : f32 to vector<1x16xf32>
    %13 = arith.divf %11, %12 : vector<1x16xf32>
    %14 = vector.broadcast %6 : vector<1x16xf32> to vector<32x16xf32>
    %15 = arith.subf %2, %14 : vector<32x16xf32>
    %cst_7 = arith.constant 9.99999974E-6 : f32
    %16 = vector.broadcast %cst_7 : f32 to vector<1x16xf32>
    %17 = arith.addf %13, %16 : vector<1x16xf32>
    %18 = math.rsqrt %17 : vector<1x16xf32>
    %19 = vector.broadcast %18 : vector<1x16xf32> to vector<32x16xf32>
    %20 = arith.mulf %15, %19 : vector<32x16xf32>
    %c0_8 = arith.constant 0 : index
    %c0_9 = arith.constant 0 : index
    %21 = vector.load %arg4[%c0_8, %c0_9] : memref<1x16xf32, #tpu.memory_space<vmem>>, vector<1x16xf32>
    %22 = vector.broadcast %21 : vector<1x16xf32> to vector<32x16xf32>
    %23 = arith.mulf %20, %22 : vector<32x16xf32>
    %c0_10 = arith.constant 0 : index
    %c0_11 = arith.constant 0 : index
    %24 = vector.load %arg5[%c0_10, %c0_11] : memref<1x16xf32, #tpu.memory_space<vmem>>, vector<1x16xf32>
    %25 = vector.broadcast %24 : vector<1x16xf32> to vector<32x16xf32>
    %26 = arith.addf %23, %25 : vector<32x16xf32>
    %cst_12 = arith.constant 0.000000e+00 : f32
    %27 = vector.broadcast %cst_12 : f32 to vector<32x16xf32>
    %28 = arith.maximumf %26, %27 : vector<32x16xf32>
    %c0_13 = arith.constant 0 : index
    %c0_14 = arith.constant 0 : index
    %29 = vector.load %arg3[%c0_13, %c0_14] : memref<16x3xf32, #tpu.memory_space<vmem>>, vector<16x3xf32>
    %cst_15 = arith.constant dense<0.000000e+00> : vector<32x3xf32>
    %30 = tpu.matmul %28, %29, %cst_15 {dimension_numbers = #tpu.dot_dimension_numbers<[1], [0], [0], [1], [0, 0, 1, 1], [], []>} : vector<32x16xf32>, vector<16x3xf32>, vector<32x3xf32> -> vector<32x3xf32>
    %cst_16 = arith.constant dense<0xFF800000> : vector<32xf32>
    %31 = vector.multi_reduction <maximumf>, %30, %cst_16 [1] : vector<32x3xf32> to vector<32xf32>
    %32 = vector.shape_cast %31 : vector<32xf32> to vector<32x1xf32>
    %33 = vector.broadcast %32 : vector<32x1xf32> to vector<32x3xf32>
    %34 = arith.subf %30, %33 : vector<32x3xf32>
    %35 = math.exp %34 : vector<32x3xf32>
    %cst_17 = arith.constant dense<0.000000e+00> : vector<32xf32>
    %36 = vector.multi_reduction <add>, %35, %cst_17 [1] : vector<32x3xf32> to vector<32xf32>
    %37 = vector.shape_cast %36 : vector<32xf32> to vector<32x1xf32>
    %38 = vector.broadcast %37 : vector<32x1xf32> to vector<32x3xf32>
    %39 = arith.divf %35, %38 : vector<32x3xf32>
    %c0_18 = arith.constant 0 : index
    %c0_19 = arith.constant 0 : index
    %40 = vector.load %arg6[%c0_18, %c0_19] : memref<32x3xf32, #tpu.memory_space<vmem>>, vector<32x3xf32>
    tpu.vector_store %arg6[%c0_18, %c0_19], %39 {strides = array<i32>} : memref<32x3xf32, #tpu.memory_space<vmem>>, vector<32x3xf32>,
    return
  }
  func.func @transform_0(%arg0: i32) -> (i32, i32) {
    %c0_i32 = arith.constant 0 : i32
    %c0_i32_0 = arith.constant 0 : i32
    %c0_i32_1 = arith.constant 0 : i32
    return %c0_i32, %c0_i32_0 : i32, i32
  }
  func.func @transform_1(%arg0: i32) -> (i32, i32) {
    %c0_i32 = arith.constant 0 : i32
    %c0_i32_0 = arith.constant 0 : i32
    %c0_i32_1 = arith.constant 0 : i32
    return %c0_i32, %c0_i32_0 : i32, i32
  }
  func.func @transform_2(%arg0: i32) -> (i32, i32) {
    %c0_i32 = arith.constant 0 : i32
    %c0_i32_0 = arith.constant 0 : i32
    %c0_i32_1 = arith.constant 0 : i32
    return %c0_i32, %c0_i32_0 : i32, i32
  }
  func.func @transform_3(%arg0: i32) -> (i32, i32) {
    %c0_i32 = arith.constant 0 : i32
    %c0_i32_0 = arith.constant 0 : i32
    %c0_i32_1 = arith.constant 0 : i32
    return %c0_i32, %c0_i32_0 : i32, i32
  }
  func.func @transform_4(%arg0: i32) -> (i32, i32) {
    %c0_i32 = arith.constant 0 : i32
    %c0_i32_0 = arith.constant 0 : i32
    %c0_i32_1 = arith.constant 0 : i32
    return %c0_i32, %c0_i32_0 : i32, i32
  }
  func.func @transform_5(%arg0: i32) -> (i32, i32) {
    %c0_i32 = arith.constant 0 : i32
    %c0_i32_0 = arith.constant 0 : i32
    %c0_i32_1 = arith.constant 0 : i32
    return %c0_i32, %c0_i32_0 : i32, i32
  }
}

module attributes {stable_mosaic.version = 11 : i64} {
  func.func @dwconv_kernel(%arg0: i32, %arg1: memref<2x8x128xf32, #tpu.memory_space<vmem>>, %arg2: memref<2x3x128xf32, #tpu.memory_space<vmem>>, %arg3: memref<2x8x128xf32, #tpu.memory_space<vmem>>) attributes {dimension_semantics = [#tpu.dimension_semantics<parallel>], iteration_bounds = array<i64: 2>, scalar_prefetch = 0 : i64, scratch_operands = 0 : i64, tpu.core_type = #tpu.core_type<tc>, window_params = [{transform_indices = @transform_0, window_bounds = array<i64: 2, 8, 128>}, {transform_indices = @transform_1, window_bounds = array<i64: 2, 3, 128>}, {transform_indices = @transform_2, window_bounds = array<i64: 2, 8, 128>}]} {
    %c0 = arith.constant 0 : index
    %c0_0 = arith.constant 0 : index
    %c0_1 = arith.constant 0 : index
    %0 = vector.load %arg1[%c0, %c0_0, %c0_1] : memref<2x8x128xf32, #tpu.memory_space<vmem>>, vector<2x8x128xf32>
    %c0_2 = arith.constant 0 : index
    %c0_3 = arith.constant 0 : index
    %c0_4 = arith.constant 0 : index
    %1 = vector.load %arg2[%c0_2, %c0_3, %c0_4] : memref<2x3x128xf32, #tpu.memory_space<vmem>>, vector<2x3x128xf32>
    %2 = vector.extract_strided_slice %1 {offsets = [0, 1, 0], sizes = [2, 1, 128], strides = [1, 1, 1]} : vector<2x3x128xf32> to vector<2x1x128xf32>
    %3 = vector.broadcast %2 : vector<2x1x128xf32> to vector<2x8x128xf32>
    %4 = arith.mulf %0, %3 : vector<2x8x128xf32>
    %c0_5 = arith.constant 0 : index
    %c0_6 = arith.constant 0 : index
    %c0_7 = arith.constant 0 : index
    %5 = vector.load %arg3[%c0_5, %c0_6, %c0_7] : memref<2x8x128xf32, #tpu.memory_space<vmem>>, vector<2x8x128xf32>
    tpu.vector_store %arg3[%c0_5, %c0_6, %c0_7], %4 {strides = array<i32>} : memref<2x8x128xf32, #tpu.memory_space<vmem>>, vector<2x8x128xf32>,
    %6 = vector.extract_strided_slice %1 {offsets = [0, 0, 0], sizes = [2, 1, 128], strides = [1, 1, 1]} : vector<2x3x128xf32> to vector<2x1x128xf32>
    %c0_8 = arith.constant 0 : index
    %c1 = arith.constant 1 : index
    %c0_9 = arith.constant 0 : index
    %7 = vector.load %arg3[%c0_8, %c1, %c0_9] : memref<2x8x128xf32, #tpu.memory_space<vmem>>, vector<2x7x128xf32>
    %8 = vector.extract_strided_slice %0 {offsets = [0, 0, 0], sizes = [2, 7, 128], strides = [1, 1, 1]} : vector<2x8x128xf32> to vector<2x7x128xf32>
    %9 = vector.broadcast %6 : vector<2x1x128xf32> to vector<2x7x128xf32>
    %10 = arith.mulf %8, %9 : vector<2x7x128xf32>
    %11 = arith.addf %7, %10 : vector<2x7x128xf32>
    %c0_10 = arith.constant 0 : index
    %c1_11 = arith.constant 1 : index
    %c0_12 = arith.constant 0 : index
    %12 = vector.load %arg3[%c0_10, %c1_11, %c0_12] : memref<2x8x128xf32, #tpu.memory_space<vmem>>, vector<2x7x128xf32>
    tpu.vector_store %arg3[%c0_10, %c1_11, %c0_12], %11 {strides = array<i32>} : memref<2x8x128xf32, #tpu.memory_space<vmem>>, vector<2x7x128xf32>,
    %13 = vector.extract_strided_slice %1 {offsets = [0, 2, 0], sizes = [2, 1, 128], strides = [1, 1, 1]} : vector<2x3x128xf32> to vector<2x1x128xf32>
    %c0_13 = arith.constant 0 : index
    %c0_14 = arith.constant 0 : index
    %c0_15 = arith.constant 0 : index
    %14 = vector.load %arg3[%c0_13, %c0_14, %c0_15] : memref<2x8x128xf32, #tpu.memory_space<vmem>>, vector<2x7x128xf32>
    %15 = vector.extract_strided_slice %0 {offsets = [0, 1, 0], sizes = [2, 7, 128], strides = [1, 1, 1]} : vector<2x8x128xf32> to vector<2x7x128xf32>
    %16 = vector.broadcast %13 : vector<2x1x128xf32> to vector<2x7x128xf32>
    %17 = arith.mulf %15, %16 : vector<2x7x128xf32>
    %18 = arith.addf %14, %17 : vector<2x7x128xf32>
    %c0_16 = arith.constant 0 : index
    %c0_17 = arith.constant 0 : index
    %c0_18 = arith.constant 0 : index
    %19 = vector.load %arg3[%c0_16, %c0_17, %c0_18] : memref<2x8x128xf32, #tpu.memory_space<vmem>>, vector<2x7x128xf32>
    tpu.vector_store %arg3[%c0_16, %c0_17, %c0_18], %18 {strides = array<i32>} : memref<2x8x128xf32, #tpu.memory_space<vmem>>, vector<2x7x128xf32>,
    return
  }
  func.func @transform_0(%arg0: i32) -> (i32, i32, i32) {
    %c0_i32 = arith.constant 0 : i32
    %c0_i32_0 = arith.constant 0 : i32
    %c0_i32_1 = arith.constant 0 : i32
    return %arg0, %c0_i32, %c0_i32_0 : i32, i32, i32
  }
  func.func @transform_1(%arg0: i32) -> (i32, i32, i32) {
    %c0_i32 = arith.constant 0 : i32
    %c0_i32_0 = arith.constant 0 : i32
    %c0_i32_1 = arith.constant 0 : i32
    return %arg0, %c0_i32, %c0_i32_0 : i32, i32, i32
  }
  func.func @transform_2(%arg0: i32) -> (i32, i32, i32) {
    %c0_i32 = arith.constant 0 : i32
    %c0_i32_0 = arith.constant 0 : i32
    %c0_i32_1 = arith.constant 0 : i32
    return %arg0, %c0_i32, %c0_i32_0 : i32, i32, i32
  }
}

</mosaic_0001>

<llo_original>
// kernel: global_tam_skeleton.3
$region0: #{global_tam_skeleton.3}
  #allocation0 [shape = 'u32[]', space=smem, size = 0x4, offset = 0x4, fixed_abs, tag = 'smem constant byte address 0x4 - core index']
  #allocation1 [shape = 'u32[144,128]{1,0:T(1,128)}', space=vmem, size = 0x12000, scoped, tag = 'internal scratch']
  %s0 = inlined_call_operand.hbm [shape: f32[32,8,16], index: 0, kind: input, shape index: {}]
  %s1 = inlined_call_operand.vmem [shape: f32[32,8], index: 1, kind: output, shape index: {}]
  %s2 = sld [smem:[#allocation0]]
  $region41: #{global_tam_skeleton.3} parent=0
    _
  %s4 = ssub.s32 1, %s2
  %s5 = scalar_select 0, %s4, %s2
  $region1: #{global_tam_skeleton.3} parent=0
    #allocation2 [shape = 'u8[131072]{0}', space=vmem, size = 0x20000, scoped, tag = 'input window, operand 0']
    #allocation3 [shape = 's32[2]{0}', space=sflag, size = 0x8, scoped, tag = 'scoped memory for global_tam_skeleton.3']
    %6 = vsyncpa [#allocation3], 0
    %s7 = scalar_lea.sflag [#allocation3], 1
    %8 = vsyncpa %s7, 0
    loop: start=0, step=1, limit=4
    $region2: #{global_tam_skeleton.3} parent=1 // loop_pre_header
      _
    $region3: #{global_tam_skeleton.3} parent=1 // loop_header
      %s10 = sphi 0, %s14
      %p11 = scmp.ge.s32.totalorder %s10, 4
      %s20 = sphi 0, %s22
      %s23 = sphi 0, %s20
      %s24 = sphi 0, %s23
      %s40 = sphi 0, %s24
      %s46 = sphi 0, %s48
      %s49 = sphi 0, %s46
      %s50 = sphi 0, %s49
      %s66 = sphi 0, %s50
    $region4: #{global_tam_skeleton.3} parent=1 // loop_header_branch
      %13 = sbr.rel (%p11) target = $region8
    $region5: #{global_tam_skeleton.3} parent=1 // loop_body
      %s15 = ssub.s32 %s10, 1
      %s16 = ssub.s32 %s10, 2
      %s17 = sadd.s32 %s10, 1
      %s18 = ssub.s32 %s10, %s17
      %p19 = scmp.eq.s32.totalorder %s18, 0
      %s21 = sadd.s32 %s20, 1
      %s22 = scalar_select %p19, %s20, %s21
      %p25 = pneg %p19
      %p26 = scmp.eq.s32.totalorder %s10, 1
      %p27 = por %p25, %p26
      %p28 = scmp.ne.s32.totalorder %s20, %s23
      %p29 = scmp.eq.s32.totalorder %s10, 0
      %p30 = por %p28, %p29
      %p31 = scmp.ne.s32.totalorder %s20, %s23
      %p32 = scmp.eq.s32.totalorder %s15, 1
      %p33 = por %p31, %p32
      %p34 = scmp.ne.s32.totalorder %s23, %s24
      %p35 = scmp.eq.s32.totalorder %s15, 0
      %p36 = por %p34, %p35
      %p37 = scmp.ne.s32.totalorder %s23, %s24
      %p38 = scmp.eq.s32.totalorder %s16, 1
      %p39 = por %p37, %p38
      %p41 = scmp.ne.s32.totalorder %s24, %s40
      %p42 = scmp.eq.s32.totalorder %s16, 0
      %p43 = por %p41, %p42
      %s44 = ssub.s32 %s10, %s17
      %p45 = scmp.eq.s32.totalorder %s44, 0
      %s47 = sadd.s32 %s46, 1
      %s48 = scalar_select %p45, %s46, %s47
      %p51 = pneg %p45
      %p52 = scmp.eq.s32.totalorder %s10, 1
      %p53 = por %p51, %p52
      %p54 = scmp.ne.s32.totalorder %s46, %s49
      %p55 = scmp.eq.s32.totalorder %s10, 0
      %p56 = por %p54, %p55
      %p57 = scmp.ne.s32.totalorder %s46, %s49
      %p58 = scmp.eq.s32.totalorder %s15, 1
      %p59 = por %p57, %p58
      %p60 = scmp.ne.s32.totalorder %s49, %s50
      %p61 = scmp.eq.s32.totalorder %s15, 0
      %p62 = por %p60, %p61
      %p63 = scmp.ne.s32.totalorder %s49, %s50
      %p64 = scmp.eq.s32.totalorder %s16, 1
      %p65 = por %p63, %p64
      %p67 = scmp.ne.s32.totalorder %s50, %s66
      %p68 = scmp.eq.s32.totalorder %s16, 0
      %p69 = por %p67, %p68
      %p70 = scmp.le.s32.totalorder 1, %s10
      %p71 = scmp.lt.s32.totalorder %s10, 3
      %p72 = pnand %p70, %p71
      %p73 = pneg %p72
      // Predicated region
      $region9: #{global_tam_skeleton.3} parent=5 // pred_check
        _
      $region10: #{global_tam_skeleton.3} parent=5 // pred_check_branch
        %75 = sbr.rel (%p72) target = $region12
      $region11: #{global_tam_skeleton.3} parent=5 // pred_region
        %s76 = ssub.s32 %s10, 1
      $region12: #{global_tam_skeleton.3} parent=5 // pred_fallthru
        _
      %p77 = scmp.lt.s32.totalorder %s10, 2
      // Predicated region
      $region13: #{global_tam_skeleton.3} parent=5 // pred_check
        %p78 = pneg %p77
      $region14: #{global_tam_skeleton.3} parent=5 // pred_check_branch
        %80 = sbr.rel (%p78) target = $region16
      $region15: #{global_tam_skeleton.3} parent=5 // pred_region
        // Predicated region
        $region17: #{global_tam_skeleton.3} parent=15 // pred_check
          %p81 = pneg %p30
        $region18: #{global_tam_skeleton.3} parent=15 // pred_check_branch
          %83 = sbr.rel (%p81) target = $region20
        $region19: #{global_tam_skeleton.3} parent=15 // pred_region
          %s84 = sand.u32 %s20, 1
          %s85 = scalar_lea.sflag [#allocation3], %s84
          %s86 = sand.u32 %s20, 1
          %s87 = smul.addr %s86, 128
          %s88 = scalar_lea.vmem [#allocation2], %s87
          %s89 = smul.u32 16, %s10
          %s91 = ssub.s32 2048, 2048
          %92 = vsyncadd %s85, %s91
          %s93 = smul.addr %s89, 128
          %s94 = scalar_lea.hbm %s0, %s93
          %s95 = sshll.u32 %s88, 4
          %s96 = int_to_ptr.vmem [resolvable:$true] %s95
          %101 = dma.hbm_to_vmem [thread:$0]  %s94, 2048, %s96, %s85, 128, 128, 8
        $region20: #{global_tam_skeleton.3} parent=15 // pred_fallthru
          _
      $region16: #{global_tam_skeleton.3} parent=5 // pred_fallthru
        _
      %p102 = scmp.le.s32.totalorder 1, %s10
      %p103 = scmp.lt.s32.totalorder %s10, 3
      %p104 = pnand %p102, %p103
      %p105 = pneg %p104
      // Predicated region
      $region21: #{global_tam_skeleton.3} parent=5 // pred_check
        _
      $region22: #{global_tam_skeleton.3} parent=5 // pred_check_branch
        %107 = sbr.rel (%p104) target = $region24
      $region23: #{global_tam_skeleton.3} parent=5 // pred_region
        %s108 = ssub.s32 %s10, 1
        %s109 = sand.u32 %s23, 1
        %s110 = scalar_lea.sflag [#allocation3], %s109
        %s111 = sand.u32 %s23, 1
        %s112 = smul.addr %s111, 128
        %s113 = scalar_lea.vmem [#allocation2], %s112
        // Predicated region
        $region25: #{global_tam_skeleton.3} parent=23 // pred_check
          %p114 = pneg %p36
        $region26: #{global_tam_skeleton.3} parent=23 // pred_check_branch
          %116 = sbr.rel (%p114) target = $region28
        $region27: #{global_tam_skeleton.3} parent=23 // pred_region
          %117 = dma.done %s110, 2048
        $region28: #{global_tam_skeleton.3} parent=23 // pred_fallthru
          _
        %s118 = sand.u32 %s23, 1
        %s119 = scalar_lea.sflag [#allocation3], %s118
        %s120 = sand.u32 %s23, 1
        %s121 = smul.addr %s120, 128
        %s122 = scalar_lea.vmem [#allocation2], %s121
        %p123 = pneg %p36
        %p124 = pneg %p33
        %p125 = pneg %p62
        %p126 = pneg %p59
        %s127 = smul.u32 2, %s15
        %p128 = scmp.lt.s32.totalorder %s127, 3
        %s129 = scalar_select %p128, %s127, 3
        %s130 = smul.addr %s129, 8
        %s131 = scalar_lea.vmem %s1, %s130
        %s132 = smul.u32 16, %s15
        %s133 = smul.u32 2, %s15
        %p134 = scmp.lt.s32.totalorder %s133, 3
        %s135 = scalar_select %p134, %s133, 3
        %s136 = smul.addr %s135, 8
        %s137 = scalar_lea.vmem %s1, %s136
        %s138 = smul.u32 2, %s15
        %v139 = vld [vmem:[%s113] sm:$0xff]
        %v140 = vld [vmem:[%s113 + $0x8] sm:$0xff]
        %v141 = vld [vmem:[%s113 + $0x10] sm:$0xff]
        %v142 = vld [vmem:[%s113 + $0x18] sm:$0xff]
        %v143 = vld [vmem:[%s113 + $0x20] sm:$0xff]
        %v144 = vld [vmem:[%s113 + $0x28] sm:$0xff]
        %v145 = vld [vmem:[%s113 + $0x30] sm:$0xff]
        %v146 = vld [vmem:[%s113 + $0x38] sm:$0xff]
        %v147 = vld [vmem:[%s113 + $0x40] sm:$0xff]
        %v148 = vld [vmem:[%s113 + $0x48] sm:$0xff]
        %v149 = vld [vmem:[%s113 + $0x50] sm:$0xff]
        %v150 = vld [vmem:[%s113 + $0x58] sm:$0xff]
        %v151 = vld [vmem:[%s113 + $0x60] sm:$0xff]
        %v152 = vld [vmem:[%s113 + $0x68] sm:$0xff]
        %v153 = vld [vmem:[%s113 + $0x70] sm:$0xff]
        %v154 = vld [vmem:[%s113 + $0x78] sm:$0xff]
        %vm155 = vcmask 130048
        %v156 = vsel %vm155, %v139, 0.0
        %157 = vadd.xlane.f32.xlu0 %v156
        %v158 = vpop.xlane.xlu0 %157
        %v159 = vsel %vm155, %v140, 0.0
        %160 = vadd.xlane.f32.xlu0 %v159
        %v161 = vpop.xlane.xlu0 %160
        %v162 = vsel %vm155, %v141, 0.0
        %163 = vadd.xlane.f32.xlu0 %v162
        %v164 = vpop.xlane.xlu0 %163
        %v165 = vsel %vm155, %v142, 0.0
        %166 = vadd.xlane.f32.xlu0 %v165
        %v167 = vpop.xlane.xlu0 %166
        %v168 = vsel %vm155, %v143, 0.0
        %169 = vadd.xlane.f32.xlu0 %v168
        %v170 = vpop.xlane.xlu0 %169
        %v171 = vsel %vm155, %v144, 0.0
        %172 = vadd.xlane.f32.xlu0 %v171
        %v173 = vpop.xlane.xlu0 %172
        %v174 = vsel %vm155, %v145, 0.0
        %175 = vadd.xlane.f32.xlu0 %v174
        %v176 = vpop.xlane.xlu0 %175
        %v177 = vsel %vm155, %v146, 0.0
        %178 = vadd.xlane.f32.xlu0 %v177
        %v179 = vpop.xlane.xlu0 %178
        %v180 = vsel %vm155, %v147, 0.0
        %181 = vadd.xlane.f32.xlu0 %v180
        %v182 = vpop.xlane.xlu0 %181
        %v183 = vsel %vm155, %v148, 0.0
        %184 = vadd.xlane.f32.xlu0 %v183
        %v185 = vpop.xlane.xlu0 %184
        %v186 = vsel %vm155, %v149, 0.0
        %187 = vadd.xlane.f32.xlu0 %v186
        %v188 = vpop.xlane.xlu0 %187
        %v189 = vsel %vm155, %v150, 0.0
        %190 = vadd.xlane.f32.xlu0 %v189
        %v191 = vpop.xlane.xlu0 %190
        %v192 = vsel %vm155, %v151, 0.0
        %193 = vadd.xlane.f32.xlu0 %v192
        %v194 = vpop.xlane.xlu0 %193
        %v195 = vsel %vm155, %v152, 0.0
        %196 = vadd.xlane.f32.xlu0 %v195
        %v197 = vpop.xlane.xlu0 %196
        %v198 = vsel %vm155, %v153, 0.0
        %199 = vadd.xlane.f32.xlu0 %v198
        %v200 = vpop.xlane.xlu0 %199
        %v201 = vsel %vm155, %v154, 0.0
        %202 = vadd.xlane.f32.xlu0 %v201
        %v203 = vpop.xlane.xlu0 %202
        %v204 = vrcp.pop 16.0
        %v205 = vmul.f32 %v158, %v204
        %v206 = vmul.f32 %v161, %v204
        %v207 = vmul.f32 %v164, %v204
        %v208 = vmul.f32 %v167, %v204
        %v209 = vmul.f32 %v170, %v204
        %v210 = vmul.f32 %v173, %v204
        %v211 = vmul.f32 %v176, %v204
        %v212 = vmul.f32 %v179, %v204
        %v213 = vmul.f32 %v182, %v204
        %v214 = vmul.f32 %v185, %v204
        %v215 = vmul.f32 %v188, %v204
        %v216 = vmul.f32 %v191, %v204
        %v217 = vmul.f32 %v194, %v204
        %v218 = vmul.f32 %v197, %v204
        %v219 = vmul.f32 %v200, %v204
        %v220 = vmul.f32 %v203, %v204
        %v237 = vlaneseq
        %v238 = vand.u32 %v237, 127
        %v239 = vlaneseq
        %v240 = vshrl.u32 %v239, 7
        %v241 = vsub.s32 %v238, %v240
        %v242 = vrot.slane %v205, %v241
        %v243 = vlaneseq
        %v244 = vshrl.u32 %v243, 7
        %v245 = vsub.s32 %v238, %v244
        %v246 = vrot.slane %v206, %v245
        %v247 = vlaneseq
        %v248 = vshrl.u32 %v247, 7
        %v249 = vsub.s32 %v238, %v248
        %v250 = vrot.slane %v207, %v249
        %v251 = vlaneseq
        %v252 = vshrl.u32 %v251, 7
        %v253 = vsub.s32 %v238, %v252
        %v254 = vrot.slane %v208, %v253
        %v255 = vlaneseq
        %v256 = vshrl.u32 %v255, 7
        %v257 = vsub.s32 %v238, %v256
        %v258 = vrot.slane %v209, %v257
        %v259 = vlaneseq
        %v260 = vshrl.u32 %v259, 7
        %v261 = vsub.s32 %v238, %v260
        %v262 = vrot.slane %v210, %v261
        %v263 = vlaneseq
        %v264 = vshrl.u32 %v263, 7
        %v265 = vsub.s32 %v238, %v264
        %v266 = vrot.slane %v211, %v265
        %v267 = vlaneseq
        %v268 = vshrl.u32 %v267, 7
        %v269 = vsub.s32 %v238, %v268
        %v270 = vrot.slane %v212, %v269
        %v271 = vlaneseq
        %v272 = vshrl.u32 %v271, 7
        %v273 = vsub.s32 %v238, %v272
        %v274 = vrot.slane %v213, %v273
        %v275 = vlaneseq
        %v276 = vshrl.u32 %v275, 7
        %v277 = vsub.s32 %v238, %v276
        %v278 = vrot.slane %v214, %v277
        %v279 = vlaneseq
        %v280 = vshrl.u32 %v279, 7
        %v281 = vsub.s32 %v238, %v280
        %v282 = vrot.slane %v215, %v281
        %v283 = vlaneseq
        %v284 = vshrl.u32 %v283, 7
        %v285 = vsub.s32 %v238, %v284
        %v286 = vrot.slane %v216, %v285
        %v287 = vlaneseq
        %v288 = vshrl.u32 %v287, 7
        %v289 = vsub.s32 %v238, %v288
        %v290 = vrot.slane %v217, %v289
        %v291 = vlaneseq
        %v292 = vshrl.u32 %v291, 7
        %v293 = vsub.s32 %v238, %v292
        %v294 = vrot.slane %v218, %v293
        %v295 = vlaneseq
        %v296 = vshrl.u32 %v295, 7
        %v297 = vsub.s32 %v238, %v296
        %v298 = vrot.slane %v219, %v297
        %v299 = vlaneseq
        %v300 = vshrl.u32 %v299, 7
        %v301 = vsub.s32 %v238, %v300
        %v302 = vrot.slane %v220, %v301
        %vm303 = vcmask 1041409
        %v304 = vsel %vm303, %v246, %v242
        %vm305 = vcmask 1042434
        %v306 = vsel %vm305, %v250, %v304
        %vm307 = vcmask 1043459
        %v308 = vsel %vm307, %v254, %v306
        %vm309 = vcmask 1044484
        %v310 = vsel %vm309, %v258, %v308
        %vm311 = vcmask 1045509
        %v312 = vsel %vm311, %v262, %v310
        %vm313 = vcmask 1046534
        %v314 = vsel %vm313, %v266, %v312
        %vm315 = vcmask 1047559
        %v316 = vsel %vm315, %v270, %v314
        %v317 = vsel %vm303, %v278, %v274
        %v318 = vsel %vm305, %v282, %v317
        %v319 = vsel %vm307, %v286, %v318
        %v320 = vsel %vm309, %v290, %v319
        %v321 = vsel %vm311, %v294, %v320
        %v322 = vsel %vm313, %v298, %v321
        %v323 = vsel %vm315, %v302, %v322
        %vm326 = vcmask 64512
        %327 = vst.msk [vmem:[%s137] sm:$0xff] %vm326, %v316
        %328 = vst.msk [vmem:[%s137 + $0x8] sm:$0xff] %vm326, %v323
        %s329 = smul.u32 2, %s15
        %p330 = scmp.lt.s32.totalorder %s329, 3
        %s331 = scalar_select %p330, %s329, 3
        %s332 = smul.addr %s331, 8
        %s333 = scalar_lea.vmem %s1, %s332
        // Predicated region
        $region29: #{global_tam_skeleton.3} parent=23 // pred_check
          %p334 = pneg %p59
        $region30: #{global_tam_skeleton.3} parent=23 // pred_check_branch
          %336 = sbr.rel (%p334) target = $region32
        $region31: #{global_tam_skeleton.3} parent=23 // pred_region
          %s337 = smul.u32 2, %s15
        $region32: #{global_tam_skeleton.3} parent=23 // pred_fallthru
          _
      $region24: #{global_tam_skeleton.3} parent=5 // pred_fallthru
        _
      %p338 = scmp.le.s32.totalorder 2, %s10
      // Predicated region
      $region33: #{global_tam_skeleton.3} parent=5 // pred_check
        %p339 = pneg %p338
      $region34: #{global_tam_skeleton.3} parent=5 // pred_check_branch
        %341 = sbr.rel (%p339) target = $region36
      $region35: #{global_tam_skeleton.3} parent=5 // pred_region
        %s342 = ssub.s32 %s10, 2
        // Predicated region
        $region37: #{global_tam_skeleton.3} parent=35 // pred_check
          %p343 = pneg %p65
        $region38: #{global_tam_skeleton.3} parent=35 // pred_check_branch
          %345 = sbr.rel (%p343) target = $region40
        $region39: #{global_tam_skeleton.3} parent=35 // pred_region
          %s346 = smul.u32 2, %s16
          %p347 = scmp.lt.s32.totalorder %s346, 3
          %s348 = scalar_select %p347, %s346, 3
          %s349 = smul.addr %s348, 8
          %s350 = scalar_lea.vmem %s1, %s349
        $region40: #{global_tam_skeleton.3} parent=35 // pred_fallthru
          _
      $region36: #{global_tam_skeleton.3} parent=5 // pred_fallthru
        _
    $region6: #{global_tam_skeleton.3} parent=1 // loop_footer
      %s14 = sadd.s32 1, %s10
    $region7: #{global_tam_skeleton.3} parent=1 // loop_footer_branch
      %9 = sbr.rel target = $region3
    $region8: #{global_tam_skeleton.3} parent=1 // loop_exit
      _
    %351 = vsyncpa [#allocation3], 1
    %s352 = scalar_lea.sflag [#allocation3], 1
    %353 = vsyncpa %s352, 1

// kernel: global_tam_skeleton.4
$region0: #{global_tam_skeleton.4}
  #allocation0 [shape = 'u32[]', space=smem, size = 0x4, offset = 0x4, fixed_abs, tag = 'smem constant byte address 0x4 - core index']
  #allocation1 [shape = 'u32[144,128]{1,0:T(1,128)}', space=vmem, size = 0x12000, scoped, tag = 'internal scratch']
  %s0 = inlined_call_operand.vmem [shape: f32[32,8], index: 0, kind: input, shape index: {}]
  %s1 = inlined_call_operand.vmem [shape: f32[8,16], index: 1, kind: input, shape index: {}]
  %s2 = inlined_call_operand.vmem [shape: f32[16,3], index: 2, kind: input, shape index: {}]
  %s3 = inlined_call_operand.vmem [shape: f32[1,16], index: 3, kind: input, shape index: {}]
  %s4 = inlined_call_operand.vmem [shape: f32[1,16], index: 4, kind: input, shape index: {}]
  %s5 = inlined_call_operand.vmem [shape: f32[32,3], index: 5, kind: output, shape index: {}]
  %s6 = sld [smem:[#allocation0]]
  $region30: #{global_tam_skeleton.4} parent=0
    _
  %s8 = ssub.s32 1, %s6
  %s9 = scalar_select 0, %s8, %s6
  // Predicated region
  $region2: #{global_tam_skeleton.4} parent=0 // pred_check
    _
  $region3: #{global_tam_skeleton.4} parent=0 // pred_check_branch
    %11 = sbr.rel (0) target = $region5
  $region4: #{global_tam_skeleton.4} parent=0 // pred_region
    _
  $region5: #{global_tam_skeleton.4} parent=0 // pred_fallthru
    _
  // Predicated region
  $region6: #{global_tam_skeleton.4} parent=0 // pred_check
    _
  $region7: #{global_tam_skeleton.4} parent=0 // pred_check_branch
    %13 = sbr.rel (0) target = $region9
  $region8: #{global_tam_skeleton.4} parent=0 // pred_region
    _
  $region9: #{global_tam_skeleton.4} parent=0 // pred_fallthru
    _
  // Predicated region
  $region10: #{global_tam_skeleton.4} parent=0 // pred_check
    _
  $region11: #{global_tam_skeleton.4} parent=0 // pred_check_branch
    %15 = sbr.rel (0) target = $region13
  $region12: #{global_tam_skeleton.4} parent=0 // pred_region
    _
  $region13: #{global_tam_skeleton.4} parent=0 // pred_fallthru
    _
  // Predicated region
  $region14: #{global_tam_skeleton.4} parent=0 // pred_check
    _
  $region15: #{global_tam_skeleton.4} parent=0 // pred_check_branch
    %17 = sbr.rel (0) target = $region17
  $region16: #{global_tam_skeleton.4} parent=0 // pred_region
    _
  $region17: #{global_tam_skeleton.4} parent=0 // pred_fallthru
    _
  // Predicated region
  $region18: #{global_tam_skeleton.4} parent=0 // pred_check
    _
  $region19: #{global_tam_skeleton.4} parent=0 // pred_check_branch
    %19 = sbr.rel (0) target = $region21
  $region20: #{global_tam_skeleton.4} parent=0 // pred_region
    _
  $region21: #{global_tam_skeleton.4} parent=0 // pred_fallthru
    _
  %v20 = vld [vmem:[%s0] sm:$0xff]
  %v21 = vld [vmem:[%s0 + $0x8] sm:$0xff]
  %v22 = vld [vmem:[%s0 + $0x10] sm:$0xff]
  %v23 = vld [vmem:[%s0 + $0x18] sm:$0xff]
  %v24 = vld [vmem:[%s1] sm:$0xff]
  %vm25 = vcmask 64512
  %v27 = vsel %vm25, %v20, 0
  %v30 = vsel %vm25, %v21, 0
  %v33 = vsel %vm25, %v22, 0
  %v36 = vsel %vm25, %v23, 0
  %38 = vmatprep.subr.mxu0 0.0
  %39 = vmatpush1.msra.mxu0 0.0
  %40 = vmatprep.subr.mxu0 0.0
  %41 = vmatpush1.msra.mxu0 0.0
  %42 = vmatprep.subr.mxu0 0.0
  %43 = vmatpush1.msra.mxu0 0.0
  %44 = vmatprep.subr.mxu0 0.0
  %45 = vmatpush1.msra.mxu0 0.0
  %46 = vmatprep.subr.mxu0 0.0
  %47 = vmatpush1.msra.mxu0 0.0
  %48 = vmatprep.subr.mxu0 0.0
  %49 = vmatpush1.msra.mxu0 0.0
  %50 = vmatprep.subr.mxu0 0.0
  %51 = vmatpush1.msra.mxu0 0.0
  %52 = vmatprep.subr.mxu0 0.0
  %53 = vmatpush1.msra.mxu0 0.0
  %54 = vmatprep.subr.mxu0 0.0
  %55 = vmatpush1.msra.mxu0 0.0
  %56 = vmatprep.subr.mxu0 0.0
  %57 = vmatpush1.msra.mxu0 0.0
  %58 = vmatprep.subr.mxu0 0.0
  %59 = vmatpush1.msra.mxu0 0.0
  %60 = vmatprep.subr.mxu0 0.0
  %61 = vmatpush1.msra.mxu0 0.0
  %62 = vmatprep.subr.mxu0 0.0
  %63 = vmatpush1.msra.mxu0 0.0
  %64 = vmatprep.subr.mxu0 0.0
  %65 = vmatpush1.msra.mxu0 0.0
  %66 = vmatprep.subr.mxu0 0.0
  %67 = vmatpush1.msra.mxu0 0.0
  %68 = vmatprep.subr.mxu0 0.0
  %69 = vmatpush1.msra.mxu0 %v24
  %70 = vmatprep.subr.mxu0 0.0
  %71 = vmatpush2.msra.mxu0 0.0
  %72 = vmatprep.subr.mxu0 0.0
  %73 = vmatpush2.msra.mxu0 0.0
  %74 = vmatprep.subr.mxu0 0.0
  %75 = vmatpush2.msra.mxu0 0.0
  %76 = vmatprep.subr.mxu0 0.0
  %77 = vmatpush2.msra.mxu0 0.0
  %78 = vmatprep.subr.mxu0 0.0
  %79 = vmatpush2.msra.mxu0 0.0
  %80 = vmatprep.subr.mxu0 0.0
  %81 = vmatpush2.msra.mxu0 0.0
  %82 = vmatprep.subr.mxu0 0.0
  %83 = vmatpush2.msra.mxu0 0.0
  %84 = vmatprep.subr.mxu0 0.0
  %85 = vmatpush2.msra.mxu0 0.0
  %86 = vmatprep.subr.mxu0 0.0
  %87 = vmatpush2.msra.mxu0 0.0
  %88 = vmatprep.subr.mxu0 0.0
  %89 = vmatpush2.msra.mxu0 0.0
  %90 = vmatprep.subr.mxu0 0.0
  %91 = vmatpush2.msra.mxu0 0.0
  %92 = vmatprep.subr.mxu0 0.0
  %93 = vmatpush2.msra.mxu0 0.0
  %94 = vmatprep.subr.mxu0 0.0
  %95 = vmatpush2.msra.mxu0 0.0
  %96 = vmatprep.subr.mxu0 0.0
  %97 = vmatpush2.msra.mxu0 0.0
  %98 = vmatprep.subr.mxu0 0.0
  %99 = vmatpush2.msra.mxu0 0.0
  %100 = vmatprep.subr.mxu0 0.0
  %101 = vmatpush2.msra.mxu0 0.0
  %102 = vmatprep.mubr.f32.mxu0 0.0
  %103 = vmatmul.mubr.f32.gmra.mxu0 %v27
  %v104 = vpop.f32.mrf.mxu0
  %v105 = vadd.f32 0.0, %v104
  %v106 = vpop.f32.mrf.mxu0
  %107 = vmatprep.mubr.f32.mxu0 0.0
  %108 = vmatmul.mubr.f32.gmra.mxu0 %v30
  %v109 = vpop.f32.mrf.mxu0
  %v110 = vadd.f32 0.0, %v109
  %v111 = vpop.f32.mrf.mxu0
  %112 = vmatprep.mubr.f32.mxu0 0.0
  %113 = vmatmul.mubr.f32.gmra.mxu0 %v33
  %v114 = vpop.f32.mrf.mxu0
  %v115 = vadd.f32 0.0, %v114
  %v116 = vpop.f32.mrf.mxu0
  %117 = vmatprep.mubr.f32.mxu0 0.0
  %118 = vmatmul.mubr.f32.gmra.mxu0 %v36
  %v119 = vpop.f32.mrf.mxu0
  %v120 = vadd.f32 0.0, %v119
  %v121 = vpop.f32.mrf.mxu0
  %122 = vdwg.mxu0
  %vm123 = vcmask 130048
  %v124 = vsel %vm123, %v105, 0.0
  %v125 = vsel %vm123, %v110, 0.0
  %v126 = vadd.f32 %v124, %v125
  %v127 = vsel %vm123, %v115, 0.0
  %v128 = vadd.f32 %v126, %v127
  %v129 = vsel %vm123, %v120, 0.0
  %v130 = vadd.f32 %v128, %v129
  %v131 = vrot.slane %v130, 4
  %v132 = vadd.f32 %v130, %v131
  %v133 = vrot.slane %v132, 2
  %v134 = vadd.f32 %v132, %v133
  %v135 = vrot.slane %v134, 1
  %v136 = vadd.f32 %v134, %v135
  %v137 = vrcp.pop 32.0
  %v138 = vmul.f32 %v136, %v137
  %v139 = vsub.f32 %v105, %v138
  %v140 = vsub.f32 %v110, %v138
  %v141 = vsub.f32 %v115, %v138
  %v142 = vsub.f32 %v120, %v138
  %v143 = vmul.f32 %v139, %v139
  %v144 = vmul.f32 %v140, %v140
  %v145 = vmul.f32 %v141, %v141
  %v146 = vmul.f32 %v142, %v142
  %v147 = vsel %vm123, %v143, 0.0
  %v148 = vsel %vm123, %v144, 0.0
  %v149 = vadd.f32 %v147, %v148
  %v150 = vsel %vm123, %v145, 0.0
  %v151 = vadd.f32 %v149, %v150
  %v152 = vsel %vm123, %v146, 0.0
  %v153 = vadd.f32 %v151, %v152
  %v154 = vrot.slane %v153, 4
  %v155 = vadd.f32 %v153, %v154
  %v156 = vrot.slane %v155, 2
  %v157 = vadd.f32 %v155, %v156
  %v158 = vrot.slane %v157, 1
  %v159 = vadd.f32 %v157, %v158
  %v160 = vmul.f32 %v159, %v137
  %v161 = vadd.f32 %v160, 1e-05
  %v162 = vrsqrt.pop %v161
  %v163 = vmul.f32 %v139, %v162
  %v164 = vmul.f32 %v140, %v162
  %v165 = vmul.f32 %v141, %v162
  %v166 = vmul.f32 %v142, %v162
  %v167 = vld [vmem:[%s3] sm:$0x1]
  %v169 = vlaneseq
  %v170 = vshrl.u32 %v169, 7
  %v171 = vsub.s32 0, %v170
  %v172 = vrot.slane %v167, %v171
  %v174 = vmul.f32 %v163, %v172
  %v175 = vmul.f32 %v164, %v172
  %v176 = vmul.f32 %v165, %v172
  %v177 = vmul.f32 %v166, %v172
  %v178 = vld [vmem:[%s4] sm:$0x1]
  %v180 = vlaneseq
  %v181 = vshrl.u32 %v180, 7
  %v182 = vsub.s32 0, %v181
  %v183 = vrot.slane %v178, %v182
  %v185 = vadd.f32 %v174, %v183
  %v186 = vadd.f32 %v175, %v183
  %v187 = vadd.f32 %v176, %v183
  %v188 = vadd.f32 %v177, %v183
  %v189 = vmax.f32 %v185, 0.0
  %v190 = vmax.f32 %v186, 0.0
  %v191 = vmax.f32 %v187, 0.0
  %v192 = vmax.f32 %v188, 0.0
  %v193 = vld [vmem:[%s2] sm:$0xff]
  %v194 = vld [vmem:[%s2 + $0x8] sm:$0xff]
  %v196 = vsel %vm123, %v189, 0
  %v199 = vsel %vm123, %v190, 0
  %v202 = vsel %vm123, %v191, 0
  %v205 = vsel %vm123, %v192, 0
  %207 = vmatprep.subr.mxu0 0.0
  %208 = vmatpush1.msra.mxu0 0.0
  %209 = vmatprep.subr.mxu0 0.0
  %210 = vmatpush1.msra.mxu0 0.0
  %211 = vmatprep.subr.mxu0 0.0
  %212 = vmatpush1.msra.mxu0 0.0
  %213 = vmatprep.subr.mxu0 0.0
  %214 = vmatpush1.msra.mxu0 0.0
  %215 = vmatprep.subr.mxu0 0.0
  %216 = vmatpush1.msra.mxu0 0.0
  %217 = vmatprep.subr.mxu0 0.0
  %218 = vmatpush1.msra.mxu0 0.0
  %219 = vmatprep.subr.mxu0 0.0
  %220 = vmatpush1.msra.mxu0 0.0
  %221 = vmatprep.subr.mxu0 0.0
  %222 = vmatpush1.msra.mxu0 0.0
  %223 = vmatprep.subr.mxu0 0.0
  %224 = vmatpush1.msra.mxu0 0.0
  %225 = vmatprep.subr.mxu0 0.0
  %226 = vmatpush1.msra.mxu0 0.0
  %227 = vmatprep.subr.mxu0 0.0
  %228 = vmatpush1.msra.mxu0 0.0
  %229 = vmatprep.subr.mxu0 0.0
  %230 = vmatpush1.msra.mxu0 0.0
  %231 = vmatprep.subr.mxu0 0.0
  %232 = vmatpush1.msra.mxu0 0.0
  %233 = vmatprep.subr.mxu0 0.0
  %234 = vmatpush1.msra.mxu0 0.0
  %235 = vmatprep.subr.mxu0 0.0
  %236 = vmatpush1.msra.mxu0 %v194
  %237 = vmatprep.subr.mxu0 0.0
  %238 = vmatpush1.msra.mxu0 %v193
  %239 = vmatprep.subr.mxu0 0.0
  %240 = vmatpush2.msra.mxu0 0.0
  %241 = vmatprep.subr.mxu0 0.0
  %242 = vmatpush2.msra.mxu0 0.0
  %243 = vmatprep.subr.mxu0 0.0
  %244 = vmatpush2.msra.mxu0 0.0
  %245 = vmatprep.subr.mxu0 0.0
  %246 = vmatpush2.msra.mxu0 0.0
  %247 = vmatprep.subr.mxu0 0.0
  %248 = vmatpush2.msra.mxu0 0.0
  %249 = vmatprep.subr.mxu0 0.0
  %250 = vmatpush2.msra.mxu0 0.0
  %251 = vmatprep.subr.mxu0 0.0
  %252 = vmatpush2.msra.mxu0 0.0
  %253 = vmatprep.subr.mxu0 0.0
  %254 = vmatpush2.msra.mxu0 0.0
  %255 = vmatprep.subr.mxu0 0.0
  %256 = vmatpush2.msra.mxu0 0.0
  %257 = vmatprep.subr.mxu0 0.0
  %258 = vmatpush2.msra.mxu0 0.0
  %259 = vmatprep.subr.mxu0 0.0
  %260 = vmatpush2.msra.mxu0 0.0
  %261 = vmatprep.subr.mxu0 0.0
  %262 = vmatpush2.msra.mxu0 0.0
  %263 = vmatprep.subr.mxu0 0.0
  %264 = vmatpush2.msra.mxu0 0.0
  %265 = vmatprep.subr.mxu0 0.0
  %266 = vmatpush2.msra.mxu0 0.0
  %267 = vmatprep.subr.mxu0 0.0
  %268 = vmatpush2.msra.mxu0 0.0
  %269 = vmatprep.subr.mxu0 0.0
  %270 = vmatpush2.msra.mxu0 0.0
  %271 = vmatprep.mubr.f32.mxu0 0.0
  %272 = vmatmul.mubr.f32.gmra.mxu0 %v196
  %v273 = vpop.f32.mrf.mxu0
  %v274 = vadd.f32 0.0, %v273
  %v275 = vpop.f32.mrf.mxu0
  %276 = vmatprep.mubr.f32.mxu0 0.0
  %277 = vmatmul.mubr.f32.gmra.mxu0 %v199
  %v278 = vpop.f32.mrf.mxu0
  %v279 = vadd.f32 0.0, %v278
  %v280 = vpop.f32.mrf.mxu0
  %281 = vmatprep.mubr.f32.mxu0 0.0
  %282 = vmatmul.mubr.f32.gmra.mxu0 %v202
  %v283 = vpop.f32.mrf.mxu0
  %v284 = vadd.f32 0.0, %v283
  %v285 = vpop.f32.mrf.mxu0
  %286 = vmatprep.mubr.f32.mxu0 0.0
  %287 = vmatmul.mubr.f32.gmra.mxu0 %v205
  %v288 = vpop.f32.mrf.mxu0
  %v289 = vadd.f32 0.0, %v288
  %v290 = vpop.f32.mrf.mxu0
  %291 = vdwg.mxu0
  %vm292 = vcmask 23552
  %v293 = vsel %vm292, %v274, -inf
  %294 = vmax.xlane.f32.xlu0 %v293
  %v295 = vpop.xlane.xlu0 %294
  %v296 = vsel %vm292, %v279, -inf
  %297 = vmax.xlane.f32.xlu0 %v296
  %v298 = vpop.xlane.xlu0 %297
  %v299 = vsel %vm292, %v284, -inf
  %300 = vmax.xlane.f32.xlu0 %v299
  %v301 = vpop.xlane.xlu0 %300
  %v302 = vsel %vm292, %v289, -inf
  %303 = vmax.xlane.f32.xlu0 %v302
  %v304 = vpop.xlane.xlu0 %303
  %v305 = vsub.f32 %v274, %v295
  %v306 = vsub.f32 %v279, %v298
  %v307 = vsub.f32 %v284, %v301
  %v308 = vsub.f32 %v289, %v304
  %v309 = vmul.f32 %v305, 1.442695
  %v310 = vpow.pop %v309
  %v311 = vmul.f32 %v306, 1.442695
  %v312 = vpow.pop %v311
  %v313 = vmul.f32 %v307, 1.442695
  %v314 = vpow.pop %v313
  %v315 = vmul.f32 %v308, 1.442695
  %v316 = vpow.pop %v315
  %v317 = vsel %vm292, %v310, 0.0
  %318 = vadd.xlane.f32.xlu0 %v317
  %v319 = vpop.xlane.xlu0 %318
  %v320 = vsel %vm292, %v312, 0.0
  %321 = vadd.xlane.f32.xlu0 %v320
  %v322 = vpop.xlane.xlu0 %321
  %v323 = vsel %vm292, %v314, 0.0
  %324 = vadd.xlane.f32.xlu0 %v323
  %v325 = vpop.xlane.xlu0 %324
  %v326 = vsel %vm292, %v316, 0.0
  %327 = vadd.xlane.f32.xlu0 %v326
  %v328 = vpop.xlane.xlu0 %327
  %v329 = vrcp.pop %v319
  %v330 = vmul.f32 %v310, %v329
  %v331 = vrcp.pop %v322
  %v332 = vmul.f32 %v312, %v331
  %v333 = vrcp.pop %v325
  %v334 = vmul.f32 %v314, %v333
  %v335 = vrcp.pop %v328
  %v336 = vmul.f32 %v316, %v335
  %337 = vst.msk [vmem:[%s5] sm:$0xff] %vm292, %v330
  %338 = vst.msk [vmem:[%s5 + $0x8] sm:$0xff] %vm292, %v332
  %339 = vst.msk [vmem:[%s5 + $0x10] sm:$0xff] %vm292, %v334
  %340 = vst.msk [vmem:[%s5 + $0x18] sm:$0xff] %vm292, %v336
  // Predicated region
  $region22: #{global_tam_skeleton.4} parent=0 // pred_check
    _
  $region23: #{global_tam_skeleton.4} parent=0 // pred_check_branch
    %342 = sbr.rel (0) target = $region25
  $region24: #{global_tam_skeleton.4} parent=0 // pred_region
    _
  $region25: #{global_tam_skeleton.4} parent=0 // pred_fallthru
    _
  // Predicated region
  $region26: #{global_tam_skeleton.4} parent=0 // pred_check
    _
  $region27: #{global_tam_skeleton.4} parent=0 // pred_check_branch
    %344 = sbr.rel (0) target = $region29
  $region28: #{global_tam_skeleton.4} parent=0 // pred_region
    _
  $region29: #{global_tam_skeleton.4} parent=0 // pred_fallthru
    _

// kernel: global_tam_skeleton.5
$region0: #{global_tam_skeleton.5}
  #allocation0 [shape = 'u32[]', space=smem, size = 0x4, offset = 0x4, fixed_abs, tag = 'smem constant byte address 0x4 - core index']
  #allocation1 [shape = 'u32[144,128]{1,0:T(1,128)}', space=vmem, size = 0x12000, scoped, tag = 'internal scratch']
  %s0 = inlined_call_operand.vmem [shape: f32[4,8,128], index: 0, kind: input, shape index: {}]
  %s1 = inlined_call_operand.vmem [shape: f32[4,3,128], index: 1, kind: input, shape index: {}]
  %s2 = inlined_call_operand.vmem [shape: f32[4,8,128], index: 2, kind: output, shape index: {}]
  %s3 = sld [smem:[#allocation0]]
  $region41: #{global_tam_skeleton.5} parent=0
    _
  %s5 = ssub.s32 1, %s3
  %s6 = scalar_select 0, %s5, %s3
  loop: start=0, step=1, limit=4
  $region2: #{global_tam_skeleton.5} parent=0 // loop_pre_header
    _
  $region3: #{global_tam_skeleton.5} parent=0 // loop_header
    %s8 = sphi 0, %s12
    %p9 = scmp.ge.s32.totalorder %s8, 4
    %s18 = sphi 0, %s20
    %s21 = sphi 0, %s18
    %s22 = sphi 0, %s21
    %s38 = sphi 0, %s22
    %s44 = sphi 0, %s46
    %s47 = sphi 0, %s44
    %s48 = sphi 0, %s47
    %s64 = sphi 0, %s48
    %s70 = sphi 0, %s72
    %s73 = sphi 0, %s70
    %s74 = sphi 0, %s73
    %s90 = sphi 0, %s74
  $region4: #{global_tam_skeleton.5} parent=0 // loop_header_branch
    %11 = sbr.rel (%p9) target = $region8
  $region5: #{global_tam_skeleton.5} parent=0 // loop_body
    %s13 = ssub.s32 %s8, 1
    %s14 = ssub.s32 %s8, 2
    %s15 = sadd.s32 %s8, 1
    %s16 = ssub.s32 %s8, %s15
    %p17 = scmp.eq.s32.totalorder %s16, 0
    %s19 = sadd.s32 %s18, 1
    %s20 = scalar_select %p17, %s18, %s19
    %p23 = pneg %p17
    %p24 = scmp.eq.s32.totalorder %s8, 1
    %p25 = por %p23, %p24
    %p26 = scmp.ne.s32.totalorder %s18, %s21
    %p27 = scmp.eq.s32.totalorder %s8, 0
    %p28 = por %p26, %p27
    %p29 = scmp.ne.s32.totalorder %s18, %s21
    %p30 = scmp.eq.s32.totalorder %s13, 1
    %p31 = por %p29, %p30
    %p32 = scmp.ne.s32.totalorder %s21, %s22
    %p33 = scmp.eq.s32.totalorder %s13, 0
    %p34 = por %p32, %p33
    %p35 = scmp.ne.s32.totalorder %s21, %s22
    %p36 = scmp.eq.s32.totalorder %s14, 1
    %p37 = por %p35, %p36
    %p39 = scmp.ne.s32.totalorder %s22, %s38
    %p40 = scmp.eq.s32.totalorder %s14, 0
    %p41 = por %p39, %p40
    %s42 = ssub.s32 %s8, %s15
    %p43 = scmp.eq.s32.totalorder %s42, 0
    %s45 = sadd.s32 %s44, 1
    %s46 = scalar_select %p43, %s44, %s45
    %p49 = pneg %p43
    %p50 = scmp.eq.s32.totalorder %s8, 1
    %p51 = por %p49, %p50
    %p52 = scmp.ne.s32.totalorder %s44, %s47
    %p53 = scmp.eq.s32.totalorder %s8, 0
    %p54 = por %p52, %p53
    %p55 = scmp.ne.s32.totalorder %s44, %s47
    %p56 = scmp.eq.s32.totalorder %s13, 1
    %p57 = por %p55, %p56
    %p58 = scmp.ne.s32.totalorder %s47, %s48
    %p59 = scmp.eq.s32.totalorder %s13, 0
    %p60 = por %p58, %p59
    %p61 = scmp.ne.s32.totalorder %s47, %s48
    %p62 = scmp.eq.s32.totalorder %s14, 1
    %p63 = por %p61, %p62
    %p65 = scmp.ne.s32.totalorder %s48, %s64
    %p66 = scmp.eq.s32.totalorder %s14, 0
    %p67 = por %p65, %p66
    %s68 = ssub.s32 %s8, %s15
    %p69 = scmp.eq.s32.totalorder %s68, 0
    %s71 = sadd.s32 %s70, 1
    %s72 = scalar_select %p69, %s70, %s71
    %p75 = pneg %p69
    %p76 = scmp.eq.s32.totalorder %s8, 1
    %p77 = por %p75, %p76
    %p78 = scmp.ne.s32.totalorder %s70, %s73
    %p79 = scmp.eq.s32.totalorder %s8, 0
    %p80 = por %p78, %p79
    %p81 = scmp.ne.s32.totalorder %s70, %s73
    %p82 = scmp.eq.s32.totalorder %s13, 1
    %p83 = por %p81, %p82
    %p84 = scmp.ne.s32.totalorder %s73, %s74
    %p85 = scmp.eq.s32.totalorder %s13, 0
    %p86 = por %p84, %p85
    %p87 = scmp.ne.s32.totalorder %s73, %s74
    %p88 = scmp.eq.s32.totalorder %s14, 1
    %p89 = por %p87, %p88
    %p91 = scmp.ne.s32.totalorder %s74, %s90
    %p92 = scmp.eq.s32.totalorder %s14, 0
    %p93 = por %p91, %p92
    %p94 = scmp.le.s32.totalorder 1, %s8
    %p95 = scmp.lt.s32.totalorder %s8, 3
    %p96 = pnand %p94, %p95
    %p97 = pneg %p96
    // Predicated region
    $region9: #{global_tam_skeleton.5} parent=5 // pred_check
      _
    $region10: #{global_tam_skeleton.5} parent=5 // pred_check_branch
      %99 = sbr.rel (%p96) target = $region12
    $region11: #{global_tam_skeleton.5} parent=5 // pred_region
      %s100 = ssub.s32 %s8, 1
    $region12: #{global_tam_skeleton.5} parent=5 // pred_fallthru
      _
    %p101 = scmp.lt.s32.totalorder %s8, 2
    // Predicated region
    $region13: #{global_tam_skeleton.5} parent=5 // pred_check
      %p102 = pneg %p101
    $region14: #{global_tam_skeleton.5} parent=5 // pred_check_branch
      %104 = sbr.rel (%p102) target = $region16
    $region15: #{global_tam_skeleton.5} parent=5 // pred_region
      // Predicated region
      $region17: #{global_tam_skeleton.5} parent=15 // pred_check
        %p105 = pneg %p28
      $region18: #{global_tam_skeleton.5} parent=15 // pred_check_branch
        %107 = sbr.rel (%p105) target = $region20
      $region19: #{global_tam_skeleton.5} parent=15 // pred_region
        %s108 = smul.u32 2, %s8
        %p109 = scmp.lt.s32.totalorder %s108, 3
        %s110 = scalar_select %p109, %s108, 3
        %s111 = smul.addr %s110, 8
        %s112 = scalar_lea.vmem %s0, %s111
        %s113 = smul.u32 2, %s8
      $region20: #{global_tam_skeleton.5} parent=15 // pred_fallthru
        _
      // Predicated region
      $region21: #{global_tam_skeleton.5} parent=15 // pred_check
        %p114 = pneg %p54
      $region22: #{global_tam_skeleton.5} parent=15 // pred_check_branch
        %116 = sbr.rel (%p114) target = $region24
      $region23: #{global_tam_skeleton.5} parent=15 // pred_region
        %s117 = smul.u32 2, %s8
        %p118 = scmp.lt.s32.totalorder %s117, 3
        %s119 = scalar_select %p118, %s117, 3
        %s120 = smul.addr %s119, 4
        %s121 = scalar_lea.vmem %s1, %s120
        %s122 = smul.u32 2, %s8
      $region24: #{global_tam_skeleton.5} parent=15 // pred_fallthru
        _
    $region16: #{global_tam_skeleton.5} parent=5 // pred_fallthru
      _
    %p123 = scmp.le.s32.totalorder 1, %s8
    %p124 = scmp.lt.s32.totalorder %s8, 3
    %p125 = pnand %p123, %p124
    %p126 = pneg %p125
    // Predicated region
    $region25: #{global_tam_skeleton.5} parent=5 // pred_check
      _
    $region26: #{global_tam_skeleton.5} parent=5 // pred_check_branch
      %128 = sbr.rel (%p125) target = $region28
    $region27: #{global_tam_skeleton.5} parent=5 // pred_region
      %s129 = ssub.s32 %s8, 1
      %s130 = smul.u32 2, %s13
      %p131 = scmp.lt.s32.totalorder %s130, 3
      %s132 = scalar_select %p131, %s130, 3
      %s133 = smul.addr %s132, 8
      %s134 = scalar_lea.vmem %s0, %s133
      %p135 = pneg %p34
      %p136 = pneg %p31
      %s137 = smul.u32 2, %s13
      %p138 = scmp.lt.s32.totalorder %s137, 3
      %s139 = scalar_select %p138, %s137, 3
      %s140 = smul.addr %s139, 4
      %s141 = scalar_lea.vmem %s1, %s140
      %p142 = pneg %p60
      %p143 = pneg %p57
      %p144 = pneg %p86
      %p145 = pneg %p83
      %s146 = smul.u32 2, %s13
      %p147 = scmp.lt.s32.totalorder %s146, 3
      %s148 = scalar_select %p147, %s146, 3
      %s149 = smul.addr %s148, 8
      %s150 = scalar_lea.vmem %s2, %s149
      %s151 = smul.u32 2, %s13
      %p152 = scmp.lt.s32.totalorder %s151, 3
      %s153 = scalar_select %p152, %s151, 3
      %s154 = smul.addr %s153, 8
      %s155 = scalar_lea.vmem %s0, %s154
      %s156 = smul.u32 2, %s13
      %s157 = smul.u32 2, %s13
      %p158 = scmp.lt.s32.totalorder %s157, 3
      %s159 = scalar_select %p158, %s157, 3
      %s160 = smul.addr %s159, 4
      %s161 = scalar_lea.vmem %s1, %s160
      %s162 = smul.u32 2, %s13
      %s163 = smul.u32 2, %s13
      %p164 = scmp.lt.s32.totalorder %s163, 3
      %s165 = scalar_select %p164, %s163, 3
      %s166 = smul.addr %s165, 8
      %s167 = scalar_lea.vmem %s2, %s166
      %s168 = smul.u32 2, %s13
      %v169 = vld [vmem:[%s155] sm:$0xff]
      %v170 = vld [vmem:[%s155 + $0x8] sm:$0xff]
      %v171 = vld [vmem:[%s161] sm:$0x7]
      %v172 = vld [vmem:[%s161 + $0x4] sm:$0x7]
      %v173 = vlaneseq
      %v174 = vshrl.u32 %v173, 7
      %v175 = vsub.s32 1, %v174
      %v176 = vrot.slane %v171, %v175
      %v177 = vlaneseq
      %v178 = vshrl.u32 %v177, 7
      %v179 = vsub.s32 1, %v178
      %v180 = vrot.slane %v172, %v179
      %v181 = vmul.f32 %v169, %v176
      %v182 = vmul.f32 %v170, %v180
      %183 = vst [vmem:[%s167] sm:$0xff] %v181
      %184 = vst [vmem:[%s167 + $0x8] sm:$0xff] %v182
      %v185 = vld [vmem:[%s167 + $0x1] sm:$0x7f]
      %v186 = vld [vmem:[%s167 + $0x9] sm:$0x7f]
      %v187 = vlaneseq
      %v188 = vshrl.u32 %v187, 7
      %v189 = vsub.s32 0, %v188
      %v190 = vrot.slane %v171, %v189
      %v191 = vlaneseq
      %v192 = vshrl.u32 %v191, 7
      %v193 = vsub.s32 0, %v192
      %v194 = vrot.slane %v172, %v193
      %v195 = vmul.f32 %v169, %v190
      %v196 = vmul.f32 %v170, %v194
      %v197 = vadd.f32 %v185, %v195
      %v198 = vadd.f32 %v186, %v196
      %199 = vst [vmem:[%s167 + $0x1] sm:$0x7f] %v197
      %200 = vst [vmem:[%s167 + $0x9] sm:$0x7f] %v198
      %v201 = vld [vmem:[%s167] sm:$0x7f]
      %v202 = vld [vmem:[%s167 + $0x8] sm:$0x7f]
      %v203 = vlaneseq
      %v204 = vshrl.u32 %v203, 7
      %v205 = vsub.s32 2, %v204
      %v206 = vrot.slane %v171, %v205
      %v207 = vlaneseq
      %v208 = vshrl.u32 %v207, 7
      %v209 = vsub.s32 2, %v208
      %v210 = vrot.slane %v172, %v209
      %v211 = vmul.f32 %v169, %v206
      %v212 = vmul.f32 %v170, %v210
      %v215 = vrot.slane %v211, 1
      %v216 = vrot.slane %v212, 1
      %v219 = vadd.f32 %v201, %v215
      %v220 = vadd.f32 %v202, %v216
      %221 = vst [vmem:[%s167] sm:$0x7f] %v219
      %222 = vst [vmem:[%s167 + $0x8] sm:$0x7f] %v220
      %s223 = smul.u32 2, %s13
      %p224 = scmp.lt.s32.totalorder %s223, 3
      %s225 = scalar_select %p224, %s223, 3
      %s226 = smul.addr %s225, 8
      %s227 = scalar_lea.vmem %s2, %s226
      // Predicated region
      $region29: #{global_tam_skeleton.5} parent=27 // pred_check
        %p228 = pneg %p83
      $region30: #{global_tam_skeleton.5} parent=27 // pred_check_branch
        %230 = sbr.rel (%p228) target = $region32
      $region31: #{global_tam_skeleton.5} parent=27 // pred_region
        %s231 = smul.u32 2, %s13
      $region32: #{global_tam_skeleton.5} parent=27 // pred_fallthru
        _
    $region28: #{global_tam_skeleton.5} parent=5 // pred_fallthru
      _
    %p232 = scmp.le.s32.totalorder 2, %s8
    // Predicated region
    $region33: #{global_tam_skeleton.5} parent=5 // pred_check
      %p233 = pneg %p232
    $region34: #{global_tam_skeleton.5} parent=5 // pred_check_branch
      %235 = sbr.rel (%p233) target = $region36
    $region35: #{global_tam_skeleton.5} parent=5 // pred_region
      %s236 = ssub.s32 %s8, 2
      // Predicated region
      $region37: #{global_tam_skeleton.5} parent=35 // pred_check
        %p237 = pneg %p89
      $region38: #{global_tam_skeleton.5} parent=35 // pred_check_branch
        %239 = sbr.rel (%p237) target = $region40
      $region39: #{global_tam_skeleton.5} parent=35 // pred_region
        %s240 = smul.u32 2, %s14
        %p241 = scmp.lt.s32.totalorder %s240, 3
        %s242 = scalar_select %p241, %s240, 3
        %s243 = smul.addr %s242, 8
        %s244 = scalar_lea.vmem %s2, %s243
      $region40: #{global_tam_skeleton.5} parent=35 // pred_fallthru
        _
    $region36: #{global_tam_skeleton.5} parent=5 // pred_fallthru
      _
  $region6: #{global_tam_skeleton.5} parent=0 // loop_footer
    %s12 = sadd.s32 1, %s8
  $region7: #{global_tam_skeleton.5} parent=0 // loop_footer_branch
    %7 = sbr.rel target = $region3
  $region8: #{global_tam_skeleton.5} parent=0 // loop_exit
    _

</llo_original>
